<compile_context>
chip_gen: v5e
topology: v5e:2x2
jax: 0.10.0
libtpu: 0.0.40
codegen_flags: <defaults>
</compile_context>

<pallas_src>
import math
import jax
import jax.numpy as jnp
from jax.experimental import pallas as pl
from jax.experimental.pallas import tpu as pltpu


def _svdconv_kernel(x_ref, w_ref, b_ref, o_ref):
    # x_ref: (nb, C_in, T)  activation tile, lanes = spatial
    # w_ref: (C_out, C_in)  recovered 1x1 weight (resident in VMEM)
    # b_ref: (C_out, 1)     f32 bias column (resident in VMEM)
    # o_ref: (nb, C_out, T)
    nb = x_ref.shape[0]
    w = w_ref[...]
    b = b_ref[...]
    for ib in range(nb):  # nb is small & static; one MXU matmul per batch row
        y = jnp.dot(w, x_ref[ib], preferred_element_type=jnp.float32)
        o_ref[ib] = (y + b).astype(o_ref.dtype)


def svd_conv2d_r(x, left_factor, right_factor, bias=None, *, padding=(0, 0),
                 tile_hw=None, vmem_limit_bytes=None):
    """1x1 SVD-factorized conv (stride=1, groups=1, zero padding).

    x:            (N, C_in, H, W)  NCHW (PyTorch convention)
    left_factor:  (C_out, rank)
    right_factor: (rank, C_in)
    bias:         (C_out,) or None
    returns:      (N, C_out, H_out, W_out)  NCHW
    """
    # TODO(synk): only padding_mode='zeros' is implemented (reflect/replicate/
    # circular would need an F.pad-equivalent in the wrapper).
    n, c_in, h, w_sp = x.shape
    c_out, rank = left_factor.shape
    assert right_factor.shape == (rank, c_in)

    ph, pw = padding
    if ph or pw:
        # kernel_size == 1: zero padding just enlarges the spatial output.
        x = jnp.pad(x, ((0, 0), (0, 0), (ph, ph), (pw, pw)))
        h, w_sp = h + 2 * ph, w_sp + 2 * pw
    hw = h * w_sp

    dtype = x.dtype
    itemsize = jnp.dtype(dtype).itemsize

    # Recover W = L @ R once in f32 (as PyTorch does), cast to the activation
    # dtype for the MXU.  HBM traffic is unchanged vs. the factored form, and
    # the fused form removes the (rank, T) f32 intermediate from the kernel.
    w_mat = jnp.dot(left_factor.astype(jnp.float32),
                    right_factor.astype(jnp.float32)).astype(dtype)

    if bias is None:
        bias = jnp.zeros((c_out,), dtype=jnp.float32)
    bias_col = bias.reshape(c_out, 1).astype(jnp.float32)

    # NCHW -> (N, C_in, H*W): contiguous reshape, no transpose, no extra HBM pass.
    x_mat = x.reshape(n, c_in, hw)

    # ---- generation-aware VMEM budget -> tile sizes -------------------------
    try:
        vmem_cap = int(pltpu.get_tpu_info().vmem_capacity_bytes)
    except Exception:
        vmem_cap = 64 * 1024 * 1024          # conservative fallback (v7x per-TC)
    budget = (vmem_cap * 3) // 4             # ~48 MiB on v7x, ~96 MiB on v5e/v6e

    fixed = 2 * c_out * c_in * itemsize + 2 * c_out * 4        # resident W + bias
    per_lane = 2 * (c_in + c_out) * itemsize                   # dbl-buffered in+out per lane per row

    hw_pad = pl.cdiv(hw, 128) * 128
    if tile_hw is None:
        tile_hw = max(128, ((budget - fixed) // per_lane) // 128 * 128)
    else:
        tile_hw = max(128, (int(tile_hw) // 128) * 128)
    tile_hw = min(tile_hw, hw_pad)

    # Small images: fold batch into the block so each grid step moves O(MiB)
    # instead of a couple of vregs.
    nb = 1
    if tile_hw >= hw_pad:
        tile_hw = hw_pad
        row_bytes = (c_in + c_out) * tile_hw * itemsize
        nb_budget = max(1, int((budget - fixed) // (2 * row_bytes)))
        nb_target = max(1, -(-(2 * 1024 * 1024) // row_bytes))   # ~2 MiB / step
        nb = max(1, min(n, nb_budget, nb_target))

    grid_n = pl.cdiv(n, nb)
    grid_hw = pl.cdiv(hw, tile_hw)

    # v7x has 2 TensorCores: keep at least 2 grid steps so both get work.
    if grid_n * grid_hw < 2:
        if hw_pad >= 256:
            tile_hw = max(128, ((hw_pad // 2) // 128) * 128)
            grid_hw = pl.cdiv(hw, tile_hw)
        elif n >= 2:
            nb = (n + 1) // 2
            grid_n = pl.cdiv(n, nb)

    if vmem_limit_bytes is None:
        need = fixed + 2 * nb * (c_in + c_out) * tile_hw * itemsize
        # Generous headroom for Mosaic internal scratch, but never below need
        # and never above ~90% of physical VMEM.
        vmem_limit_bytes = int(min((vmem_cap * 9) // 10,
                                   max(2 * need, 32 * 1024 * 1024)))

    cost = pl.CostEstimate(
        flops=2 * n * hw * c_in * c_out,
        transcendentals=0,
        bytes_accessed=(n * hw * (c_in + c_out) * itemsize
                        + c_out * c_in * itemsize + c_out * 4),
    )

    out = pl.pallas_call(
        _svdconv_kernel,
        out_shape=jax.ShapeDtypeStruct((n, c_out, hw), dtype),
        grid_spec=pltpu.PrefetchScalarGridSpec(
            num_scalar_prefetch=0,
            grid=(grid_n, grid_hw),
            in_specs=[
                # activation tile (possibly batch-folded)
                pl.BlockSpec((nb, c_in, tile_hw), lambda b, j: (b, 0, j)),
                # full weight + bias, constant index_map -> stay VMEM-resident
                pl.BlockSpec((c_out, c_in), lambda b, j: (0, 0)),
                pl.BlockSpec((c_out, 1), lambda b, j: (0, 0)),
            ],
            out_specs=pl.BlockSpec((nb, c_out, tile_hw), lambda b, j: (b, 0, j)),
        ),
        compiler_params=pltpu.CompilerParams(
            dimension_semantics=("parallel", "parallel"),
            vmem_limit_bytes=vmem_limit_bytes),
        cost_estimate=cost,
    )(x_mat, w_mat, bias_col)

    # (N, C_out, H*W) -> NCHW, contiguous reshape only.
    return out.reshape(n, c_out, h, w_sp)


def _xavier_uniform(key, shape):
    fan_out, fan_in = shape[0], shape[1]
    bound = math.sqrt(6.0 / (fan_in + fan_out))
    return jax.random.uniform(key, shape, jnp.float32, -bound, bound)


if __name__ == "__main__":
    # Small, module-consistent shapes.
    N, C_IN, H, W = 2, 4, 16, 16
    C_OUT, RANK = 8, 2

    key = jax.random.PRNGKey(0)
    kx, kl, kr, kb = jax.random.split(key, 4)

    x = jax.random.normal(kx, (N, C_IN, H, W), jnp.float32)
    left_factor = _xavier_uniform(kl, (C_OUT, RANK))    # runtime shape (SVD path)
    right_factor = _xavier_uniform(kr, (RANK, C_IN))    # runtime shape (SVD path)
    fan_in = C_IN  # fan_in of recovered (C_out, C_in, 1, 1) weight
    bound = 1.0 / math.sqrt(fan_in)
    bias = jax.random.uniform(kb, (C_OUT,), jnp.float32, -bound, bound)

    out = svd_conv2d_r(x, left_factor, right_factor, bias)
    out = jax.block_until_ready(out)

    # Pure-JAX reference.
    w_ref = left_factor @ right_factor                              # (C_out, C_in)
    ref = jnp.einsum("oi,nihw->nohw", w_ref, x) + bias[None, :, None, None]
    assert out.shape == (N, C_OUT, H, W)
    assert jnp.allclose(out, ref, atol=1e-5, rtol=1e-5), "mismatch vs reference"

    print("KERNEL_OK")
</pallas_src>

<mosaic_0001>
module attributes {stable_mosaic.version = 11 : i64} {
  func.func @_svdconv_kernel(%arg0: i32, %arg1: i32, %arg2: memref<2x4x128xf32, #tpu.memory_space<vmem>>, %arg3: memref<8x4xf32, #tpu.memory_space<vmem>>, %arg4: memref<8x1xf32, #tpu.memory_space<vmem>>, %arg5: memref<2x8x128xf32, #tpu.memory_space<vmem>>) attributes {dimension_semantics = [#tpu.dimension_semantics<parallel>, #tpu.dimension_semantics<parallel>], iteration_bounds = array<i64: 1, 2>, scalar_prefetch = 0 : i64, scratch_operands = 0 : i64, tpu.core_type = #tpu.core_type<tc>, window_params = [{transform_indices = @transform_0, window_bounds = array<i64: 2, 4, 128>}, {pipeline_mode = #tpu.pipeline_mode<synchronous>, transform_indices = @transform_1, window_bounds = array<i64: 8, 4>}, {pipeline_mode = #tpu.pipeline_mode<synchronous>, transform_indices = @transform_2, window_bounds = array<i64: 8, 1>}, {transform_indices = @transform_3, window_bounds = array<i64: 2, 8, 128>}]} {
    %c0 = arith.constant 0 : index
    %c0_0 = arith.constant 0 : index
    %0 = vector.load %arg3[%c0, %c0_0] : memref<8x4xf32, #tpu.memory_space<vmem>>, vector<8x4xf32>
    %c0_1 = arith.constant 0 : index
    %c0_2 = arith.constant 0 : index
    %1 = vector.load %arg4[%c0_1, %c0_2] : memref<8x1xf32, #tpu.memory_space<vmem>>, vector<8x1xf32>
    %c0_3 = arith.constant 0 : index
    %c0_4 = arith.constant 0 : index
    %c0_5 = arith.constant 0 : index
    %2 = vector.load %arg2[%c0_3, %c0_4, %c0_5] : memref<2x4x128xf32, #tpu.memory_space<vmem>>, vector<1x4x128xf32>
    %3 = vector.shape_cast %2 : vector<1x4x128xf32> to vector<4x128xf32>
    %cst = arith.constant dense<0.000000e+00> : vector<8x128xf32>
    %4 = tpu.matmul %0, %3, %cst {dimension_numbers = #tpu.dot_dimension_numbers<[1], [0], [0], [1], [0, 0, 1, 1], [], []>} : vector<8x4xf32>, vector<4x128xf32>, vector<8x128xf32> -> vector<8x128xf32>
    %5 = vector.broadcast %1 : vector<8x1xf32> to vector<8x128xf32>
    %6 = arith.addf %4, %5 : vector<8x128xf32>
    %c0_6 = arith.constant 0 : index
    %c0_7 = arith.constant 0 : index
    %c0_8 = arith.constant 0 : index
    %7 = vector.load %arg5[%c0_6, %c0_7, %c0_8] : memref<2x8x128xf32, #tpu.memory_space<vmem>>, vector<1x8x128xf32>
    %8 = vector.shape_cast %7 : vector<1x8x128xf32> to vector<8x128xf32>
    %9 = vector.shape_cast %6 : vector<8x128xf32> to vector<1x8x128xf32>
    tpu.vector_store %arg5[%c0_6, %c0_7, %c0_8], %9 {strides = array<i32>} : memref<2x8x128xf32, #tpu.memory_space<vmem>>, vector<1x8x128xf32>,
    %c1 = arith.constant 1 : index
    %c0_9 = arith.constant 0 : index
    %c0_10 = arith.constant 0 : index
    %10 = vector.load %arg2[%c1, %c0_9, %c0_10] : memref<2x4x128xf32, #tpu.memory_space<vmem>>, vector<1x4x128xf32>
    %11 = vector.shape_cast %10 : vector<1x4x128xf32> to vector<4x128xf32>
    %cst_11 = arith.constant dense<0.000000e+00> : vector<8x128xf32>
    %12 = tpu.matmul %0, %11, %cst_11 {dimension_numbers = #tpu.dot_dimension_numbers<[1], [0], [0], [1], [0, 0, 1, 1], [], []>} : vector<8x4xf32>, vector<4x128xf32>, vector<8x128xf32> -> vector<8x128xf32>
    %13 = vector.broadcast %1 : vector<8x1xf32> to vector<8x128xf32>
    %14 = arith.addf %12, %13 : vector<8x128xf32>
    %c1_12 = arith.constant 1 : index
    %c0_13 = arith.constant 0 : index
    %c0_14 = arith.constant 0 : index
    %15 = vector.load %arg5[%c1_12, %c0_13, %c0_14] : memref<2x8x128xf32, #tpu.memory_space<vmem>>, vector<1x8x128xf32>
    %16 = vector.shape_cast %15 : vector<1x8x128xf32> to vector<8x128xf32>
    %17 = vector.shape_cast %14 : vector<8x128xf32> to vector<1x8x128xf32>
    tpu.vector_store %arg5[%c1_12, %c0_13, %c0_14], %17 {strides = array<i32>} : memref<2x8x128xf32, #tpu.memory_space<vmem>>, vector<1x8x128xf32>,
    return
  }
  func.func @transform_0(%arg0: i32, %arg1: i32) -> (i32, i32, i32) {
    %c0_i32 = arith.constant 0 : i32
    %c0_i32_0 = arith.constant 0 : i32
    return %arg0, %c0_i32, %arg1 : i32, i32, i32
  }
  func.func @transform_1(%arg0: i32, %arg1: i32) -> (i32, i32) {
    %c0_i32 = arith.constant 0 : i32
    %c0_i32_0 = arith.constant 0 : i32
    %c0_i32_1 = arith.constant 0 : i32
    return %c0_i32, %c0_i32_0 : i32, i32
  }
  func.func @transform_2(%arg0: i32, %arg1: i32) -> (i32, i32) {
    %c0_i32 = arith.constant 0 : i32
    %c0_i32_0 = arith.constant 0 : i32
    %c0_i32_1 = arith.constant 0 : i32
    return %c0_i32, %c0_i32_0 : i32, i32
  }
  func.func @transform_3(%arg0: i32, %arg1: i32) -> (i32, i32, i32) {
    %c0_i32 = arith.constant 0 : i32
    %c0_i32_0 = arith.constant 0 : i32
    return %arg0, %c0_i32, %arg1 : i32, i32, i32
  }
}

</mosaic_0001>

<llo_original>
// kernel: tpu_custom_call.1
$region0: #{tpu_custom_call.1}
  #allocation0 [shape = 'u32[]', space=smem, size = 0x4, offset = 0x4, fixed_abs, tag = 'smem constant byte address 0x4 - core index']
  #allocation1 [shape = 'u32[72,128]{1,0:T(1,128)}', space=vmem, size = 0x9000, scoped, tag = 'internal scratch']
  %s0 = inlined_call_operand.vmem [shape: f32[2,4,256], index: 0, kind: input, shape index: {}]
  %s1 = inlined_call_operand.vmem [shape: f32[8,4], index: 1, kind: input, shape index: {}]
  %s2 = inlined_call_operand.vmem [shape: f32[8,1], index: 2, kind: input, shape index: {}]
  %s3 = inlined_call_operand.hbm [shape: f32[2,8,256], index: 3, kind: output, shape index: {}]
  %s4 = sld [smem:[#allocation0]]
  $region86: #{tpu_custom_call.1} parent=0
    _
  %s6 = ssub.s32 1, %s4
  %s7 = scalar_select 0, %s6, %s4
  $region1: #{tpu_custom_call.1} parent=0
    #allocation2 [shape = 'u8[8192]{0}', space=vmem, size = 0x2000, scoped, tag = 'input window, operand 0']
    #allocation3 [shape = 'u8[16384]{0}', space=vmem, size = 0x4000, scoped, tag = 'output window, operand 0']
    #allocation4 [shape = 's32[2]{0}', space=sflag, size = 0x8, scoped, tag = 'scoped memory for tpu_custom_call.1']
    %8 = vsyncpa [#allocation4], 0
    %s9 = scalar_lea.sflag [#allocation4], 1
    %10 = vsyncpa %s9, 0
    loop: start=0, step=1, limit=4
    $region2: #{tpu_custom_call.1} parent=1 // loop_pre_header
      _
    $region3: #{tpu_custom_call.1} parent=1 // loop_header
      %s12 = sphi 0, %s16
      %p13 = scmp.ge.s32.totalorder %s12, 4
      %s19 = sphi 0, %s31
      %s20 = sphi 0, %s27
      %s21 = sphi 0, %s19
      %s22 = sphi 0, %s20
      %s23 = sphi 0, %s21
      %s24 = sphi 0, %s22
      %s36 = sphi 0, %s38
      %s39 = sphi 0, %s36
      %s40 = sphi 0, %s39
      %s56 = sphi 0, %s40
      %s60 = sphi 0, %s60
      %s62 = sphi 0, %s60
      %s63 = sphi 0, %s62
      %s77 = sphi 0, %s63
      %s81 = sphi 0, %s81
      %s83 = sphi 0, %s81
      %s84 = sphi 0, %s83
      %s98 = sphi 0, %s84
      %s106 = sphi 0, %s108
      %s109 = sphi 0, %s106
      %s110 = sphi 0, %s109
      %s126 = sphi 0, %s110
    $region4: #{tpu_custom_call.1} parent=1 // loop_header_branch
      %15 = sbr.rel (%p13) target = $region8
    $region5: #{tpu_custom_call.1} parent=1 // loop_body
      %s17 = ssub.s32 %s12, 1
      %s18 = ssub.s32 %s12, 2
      %s25 = sadd.s32 1, %s20
      %p26 = scmp.ge.s32.totalorder %s25, 2
      %s27 = scalar_select %p26, 0, %s25
      %s28 = sadd.s32 1, %s19
      %s29 = scalar_select %p26, %s28, %s19
      %p30 = scmp.ge.s32.totalorder %s29, 1
      %s31 = scalar_select %p30, 0, %s29
      %s32 = ssub.s32 %s19, %s31
      %s33 = ssub.s32 %s20, %s27
      %s34 = sor.u32 %s32, %s33
      %p35 = scmp.eq.s32.totalorder %s34, 0
      %s37 = sadd.s32 %s36, 1
      %s38 = scalar_select %p35, %s36, %s37
      %p41 = pneg %p35
      %p42 = scmp.eq.s32.totalorder %s12, 1
      %p43 = por %p41, %p42
      %p44 = scmp.ne.s32.totalorder %s36, %s39
      %p45 = scmp.eq.s32.totalorder %s12, 0
      %p46 = por %p44, %p45
      %p47 = scmp.ne.s32.totalorder %s36, %s39
      %p48 = scmp.eq.s32.totalorder %s17, 1
      %p49 = por %p47, %p48
      %p50 = scmp.ne.s32.totalorder %s39, %s40
      %p51 = scmp.eq.s32.totalorder %s17, 0
      %p52 = por %p50, %p51
      %p53 = scmp.ne.s32.totalorder %s39, %s40
      %p54 = scmp.eq.s32.totalorder %s18, 1
      %p55 = por %p53, %p54
      %p57 = scmp.ne.s32.totalorder %s40, %s56
      %p58 = scmp.eq.s32.totalorder %s18, 0
      %p59 = por %p57, %p58
      %s61 = sadd.s32 %s60, 1
      %p64 = scmp.eq.s32.totalorder %s12, 1
      %p65 = scmp.ne.s32.totalorder %s60, %s62
      %p66 = scmp.eq.s32.totalorder %s12, 0
      %p67 = por %p65, %p66
      %p68 = scmp.ne.s32.totalorder %s60, %s62
      %p69 = scmp.eq.s32.totalorder %s17, 1
      %p70 = por %p68, %p69
      %p71 = scmp.ne.s32.totalorder %s62, %s63
      %p72 = scmp.eq.s32.totalorder %s17, 0
      %p73 = por %p71, %p72
      %p74 = scmp.ne.s32.totalorder %s62, %s63
      %p75 = scmp.eq.s32.totalorder %s18, 1
      %p76 = por %p74, %p75
      %p78 = scmp.ne.s32.totalorder %s63, %s77
      %p79 = scmp.eq.s32.totalorder %s18, 0
      %p80 = por %p78, %p79
      %s82 = sadd.s32 %s81, 1
      %p85 = scmp.eq.s32.totalorder %s12, 1
      %p86 = scmp.ne.s32.totalorder %s81, %s83
      %p87 = scmp.eq.s32.totalorder %s12, 0
      %p88 = por %p86, %p87
      %p89 = scmp.ne.s32.totalorder %s81, %s83
      %p90 = scmp.eq.s32.totalorder %s17, 1
      %p91 = por %p89, %p90
      %p92 = scmp.ne.s32.totalorder %s83, %s84
      %p93 = scmp.eq.s32.totalorder %s17, 0
      %p94 = por %p92, %p93
      %p95 = scmp.ne.s32.totalorder %s83, %s84
      %p96 = scmp.eq.s32.totalorder %s18, 1
      %p97 = por %p95, %p96
      %p99 = scmp.ne.s32.totalorder %s84, %s98
      %p100 = scmp.eq.s32.totalorder %s18, 0
      %p101 = por %p99, %p100
      %s102 = ssub.s32 %s19, %s31
      %s103 = ssub.s32 %s20, %s27
      %s104 = sor.u32 %s102, %s103
      %p105 = scmp.eq.s32.totalorder %s104, 0
      %s107 = sadd.s32 %s106, 1
      %s108 = scalar_select %p105, %s106, %s107
      %p111 = pneg %p105
      %p112 = scmp.eq.s32.totalorder %s12, 1
      %p113 = por %p111, %p112
      %p114 = scmp.ne.s32.totalorder %s106, %s109
      %p115 = scmp.eq.s32.totalorder %s12, 0
      %p116 = por %p114, %p115
      %p117 = scmp.ne.s32.totalorder %s106, %s109
      %p118 = scmp.eq.s32.totalorder %s17, 1
      %p119 = por %p117, %p118
      %p120 = scmp.ne.s32.totalorder %s109, %s110
      %p121 = scmp.eq.s32.totalorder %s17, 0
      %p122 = por %p120, %p121
      %p123 = scmp.ne.s32.totalorder %s109, %s110
      %p124 = scmp.eq.s32.totalorder %s18, 1
      %p125 = por %p123, %p124
      %p127 = scmp.ne.s32.totalorder %s110, %s126
      %p128 = scmp.eq.s32.totalorder %s18, 0
      %p129 = por %p127, %p128
      %p130 = scmp.le.s32.totalorder 1, %s12
      %p131 = scmp.lt.s32.totalorder %s12, 3
      %p132 = pnand %p130, %p131
      %p133 = pneg %p132
      // Predicated region
      $region9: #{tpu_custom_call.1} parent=5 // pred_check
        _
      $region10: #{tpu_custom_call.1} parent=5 // pred_check_branch
        %135 = sbr.rel (%p132) target = $region12
      $region11: #{tpu_custom_call.1} parent=5 // pred_region
        %s136 = ssub.s32 %s12, 1
        // Predicated region
        $region13: #{tpu_custom_call.1} parent=11 // pred_check
          %p137 = pneg %p73
        $region14: #{tpu_custom_call.1} parent=11 // pred_check_branch
          %139 = sbr.rel (%p137) target = $region16
        $region15: #{tpu_custom_call.1} parent=11 // pred_region
          _
        $region16: #{tpu_custom_call.1} parent=11 // pred_fallthru
          _
        // Predicated region
        $region17: #{tpu_custom_call.1} parent=11 // pred_check
          %p140 = pneg %p94
        $region18: #{tpu_custom_call.1} parent=11 // pred_check_branch
          %142 = sbr.rel (%p140) target = $region20
        $region19: #{tpu_custom_call.1} parent=11 // pred_region
          _
        $region20: #{tpu_custom_call.1} parent=11 // pred_fallthru
          _
      $region12: #{tpu_custom_call.1} parent=5 // pred_fallthru
        _
      %p143 = scmp.lt.s32.totalorder %s12, 2
      // Predicated region
      $region21: #{tpu_custom_call.1} parent=5 // pred_check
        %p144 = pneg %p143
      $region22: #{tpu_custom_call.1} parent=5 // pred_check_branch
        %146 = sbr.rel (%p144) target = $region24
      $region23: #{tpu_custom_call.1} parent=5 // pred_region
        // Predicated region
        $region25: #{tpu_custom_call.1} parent=23 // pred_check
          %p147 = pneg %p46
        $region26: #{tpu_custom_call.1} parent=23 // pred_check_branch
          %149 = sbr.rel (%p147) target = $region28
        $region27: #{tpu_custom_call.1} parent=23 // pred_region
          %s150 = sand.u32 %s36, 1
          %s151 = sand.u32 %s36, 1
          %s152 = smul.addr %s151, 8
          %s153 = scalar_lea.vmem [#allocation2], %s152
          %s154 = smul.u32 2, %s19
          %s155 = smul.addr %s154, 2
          %s156 = sadd.s32 %s20, %s155
          %s157 = smul.addr %s156, 4
          %s158 = scalar_lea.vmem %s0, %s157
          // Predicated region
          $region29: #{tpu_custom_call.1} parent=27 // pred_check
            _
          $region30: #{tpu_custom_call.1} parent=27 // pred_check_branch
            %160 = sbr.rel (0) target = $region32
          $region31: #{tpu_custom_call.1} parent=27 // pred_region
            // Predicated region
            $region33: #{tpu_custom_call.1} parent=31 // pred_check
              _
            $region34: #{tpu_custom_call.1} parent=31 // pred_check_branch
              %162 = sbr.rel target = $region36
            $region35: #{tpu_custom_call.1} parent=31 // pred_region
              // Predicated region
              $region48: #{tpu_custom_call.1} parent=35 // pred_check
                _
              $region49: #{tpu_custom_call.1} parent=35 // pred_check_branch
                %180 = sbr.rel (0) target = $region51
              $region50: #{tpu_custom_call.1} parent=35 // pred_region
                loop: start=0, step=1, limit=1
                $region52: #{tpu_custom_call.1} parent=50 // loop_pre_header
                  _
                $region53: #{tpu_custom_call.1} parent=50 // loop_header
                  %s182 = sphi 0, %s186
                  %p183 = scmp.ge.s32.totalorder %s182, 1
                  %s187 = sphi %s158, %s158
                  %s188 = sphi %s153, %s153
                $region54: #{tpu_custom_call.1} parent=50 // loop_header_branch
                  %185 = sbr.rel (%p183) target = $region58
                $region55: #{tpu_custom_call.1} parent=50 // loop_body
                  _
                $region56: #{tpu_custom_call.1} parent=50 // loop_footer
                  %s186 = sadd.s32 1, %s182
                $region57: #{tpu_custom_call.1} parent=50 // loop_footer_branch
                  %181 = sbr.rel target = $region53
                $region58: #{tpu_custom_call.1} parent=50 // loop_exit
                  _
                %s190 = ssub.s32 16, 1
                loop: start=0, step=1, limit=1
                $region59: #{tpu_custom_call.1} parent=50 // loop_pre_header
                  _
                $region60: #{tpu_custom_call.1} parent=50 // loop_header
                  %s192 = sphi 0, %s196
                  %p193 = scmp.ge.s32.totalorder %s192, 1
                  %s197 = sphi %s158, %s158
                  %s198 = sphi %s153, %s153
                $region61: #{tpu_custom_call.1} parent=50 // loop_header_branch
                  %195 = sbr.rel (%p193) target = $region65
                $region62: #{tpu_custom_call.1} parent=50 // loop_body
                  %v199 = vld [vmem:[%s197] sm:%s190]
                  %200 = vst [vmem:[%s198] sm:%s190] %v199
                  %v201 = vld [vmem:[%s197 + $0x8] sm:%s190]
                  %202 = vst [vmem:[%s198 + $0x4] sm:%s190] %v201
                $region63: #{tpu_custom_call.1} parent=50 // loop_footer
                  %s196 = sadd.s32 1, %s192
                $region64: #{tpu_custom_call.1} parent=50 // loop_footer_branch
                  %191 = sbr.rel target = $region60
                $region65: #{tpu_custom_call.1} parent=50 // loop_exit
                  _
              $region51: #{tpu_custom_call.1} parent=35 // pred_fallthru
                _
            $region36: #{tpu_custom_call.1} parent=31 // pred_fallthru
              _
            // Predicated region
            $region37: #{tpu_custom_call.1} parent=31 // pred_check
              _
            $region38: #{tpu_custom_call.1} parent=31 // pred_check_branch
              %164 = sbr.rel (0) target = $region40
            $region39: #{tpu_custom_call.1} parent=31 // pred_region
              %s166 = ssub.s32 16, 1
              loop: start=0, step=1, limit=1
              $region41: #{tpu_custom_call.1} parent=39 // loop_pre_header
                _
              $region42: #{tpu_custom_call.1} parent=39 // loop_header
                %s168 = sphi 0, %s172
                %p169 = scmp.ge.s32.totalorder %s168, 1
                %s173 = sphi %s158, %s158
                %s174 = sphi %s153, %s153
              $region43: #{tpu_custom_call.1} parent=39 // loop_header_branch
                %171 = sbr.rel (%p169) target = $region47
              $region44: #{tpu_custom_call.1} parent=39 // loop_body
                %v175 = vld [vmem:[%s173] sm:%s166]
                %176 = vst [vmem:[%s174] sm:%s166] %v175
                %v177 = vld [vmem:[%s173 + $0x8] sm:%s166]
                %178 = vst [vmem:[%s174 + $0x4] sm:%s166] %v177
              $region45: #{tpu_custom_call.1} parent=39 // loop_footer
                %s172 = sadd.s32 1, %s168
              $region46: #{tpu_custom_call.1} parent=39 // loop_footer_branch
                %167 = sbr.rel target = $region42
              $region47: #{tpu_custom_call.1} parent=39 // loop_exit
                _
            $region40: #{tpu_custom_call.1} parent=31 // pred_fallthru
              _
          $region32: #{tpu_custom_call.1} parent=27 // pred_fallthru
            _
          %203 = vnop
        $region28: #{tpu_custom_call.1} parent=23 // pred_fallthru
          _
      $region24: #{tpu_custom_call.1} parent=5 // pred_fallthru
        _
      %p204 = scmp.le.s32.totalorder 1, %s12
      %p205 = scmp.lt.s32.totalorder %s12, 3
      %p206 = pnand %p204, %p205
      %p207 = pneg %p206
      // Predicated region
      $region66: #{tpu_custom_call.1} parent=5 // pred_check
        _
      $region67: #{tpu_custom_call.1} parent=5 // pred_check_branch
        %209 = sbr.rel (%p206) target = $region69
      $region68: #{tpu_custom_call.1} parent=5 // pred_region
        %s210 = ssub.s32 %s12, 1
        %s211 = sand.u32 %s39, 1
        %s212 = sand.u32 %s39, 1
        %s213 = smul.addr %s212, 8
        %s214 = scalar_lea.vmem [#allocation2], %s213
        // Predicated region
        $region70: #{tpu_custom_call.1} parent=68 // pred_check
          %p215 = pneg %p52
        $region71: #{tpu_custom_call.1} parent=68 // pred_check_branch
          %217 = sbr.rel (%p215) target = $region73
        $region72: #{tpu_custom_call.1} parent=68 // pred_region
          _
        $region73: #{tpu_custom_call.1} parent=68 // pred_fallthru
          _
        %s218 = sand.u32 %s39, 1
        %s219 = sand.u32 %s39, 1
        %s220 = smul.addr %s219, 8
        %s221 = scalar_lea.vmem [#allocation2], %s220
        %p222 = pneg %p52
        %p223 = pneg %p49
        %p224 = pneg %p73
        %p225 = pneg %p70
        %p226 = pneg %p94
        %p227 = pneg %p91
        %p228 = pneg %p122
        %p229 = pneg %p119
        %s230 = sand.u32 %s109, 1
        %s231 = scalar_lea.sflag [#allocation4], %s230
        %s232 = sand.u32 %s109, 1
        %s233 = smul.addr %s232, 16
        %s234 = scalar_lea.vmem [#allocation3], %s233
        %s235 = smul.u32 2, %s21
        %s236 = smul.u32 2, %s21
        %v237 = vld [vmem:[%s1] sm:$0xff]
        %v238 = vld [vmem:[%s2] sm:$0xff]
        %v239 = vld [vmem:[%s214] sm:$0xf]
        %241 = vset.pattern.permute.xlu0 0
        %242 = vperm.xlu0 %241, %v238
        %v243 = vpop.permute.xlu0 %242
        %vm245 = vcmask 31744
        %v247 = vsel %vm245, %v237, 0
        %vm249 = vcmask 1043456
        %v251 = vsel %vm249, %v239, 0
        %253 = vmatpush.msra.mxu0 0.0
        %254 = vmatpush.msra.mxu0 0.0
        %255 = vmatpush.msra.mxu0 0.0
        %256 = vmatpush.msra.mxu0 0.0
        %257 = vmatpush.msra.mxu0 0.0
        %258 = vmatpush.msra.mxu0 0.0
        %259 = vmatpush.msra.mxu0 0.0
        %260 = vmatpush.msra.mxu0 0.0
        %261 = vmatpush.msra.mxu0 0.0
        %262 = vmatpush.msra.mxu0 0.0
        %263 = vmatpush.msra.mxu0 0.0
        %264 = vmatpush.msra.mxu0 0.0
        %265 = vmatpush.msra.mxu0 0.0
        %266 = vmatpush.msra.mxu0 0.0
        %267 = vmatpush.msra.mxu0 0.0
        %268 = vmatpush.msra.mxu0 %v251
        %269 = vmatmul.f32.gmra.mxu0 %v247
        %v270 = vpop.f32.mrf.mxu0
        %v271 = vadd.f32 %v243, %v270
        %272 = vdwg.mxu0
        %273 = vst [vmem:[%s234] sm:$0xff] %v271
        %s274 = scalar_lea.vmem %s214, 4 [#allocation2]
        %v275 = vld [vmem:[%s274] sm:$0xf]
        %v277 = vsel %vm249, %v275, 0
        %279 = vmatpush.msra.mxu0 0.0
        %280 = vmatpush.msra.mxu0 0.0
        %281 = vmatpush.msra.mxu0 0.0
        %282 = vmatpush.msra.mxu0 0.0
        %283 = vmatpush.msra.mxu0 0.0
        %284 = vmatpush.msra.mxu0 0.0
        %285 = vmatpush.msra.mxu0 0.0
        %286 = vmatpush.msra.mxu0 0.0
        %287 = vmatpush.msra.mxu0 0.0
        %288 = vmatpush.msra.mxu0 0.0
        %289 = vmatpush.msra.mxu0 0.0
        %290 = vmatpush.msra.mxu0 0.0
        %291 = vmatpush.msra.mxu0 0.0
        %292 = vmatpush.msra.mxu0 0.0
        %293 = vmatpush.msra.mxu0 0.0
        %294 = vmatpush.msra.mxu0 %v277
        %295 = vmatmul.f32.gmra.mxu0 %v247
        %v296 = vpop.f32.mrf.mxu0
        %v297 = vadd.f32 %v243, %v296
        %298 = vdwg.mxu0
        %s299 = scalar_lea.vmem %s234, 8 [#allocation3]
        %300 = vst [vmem:[%s299] sm:$0xff] %v297
        %s301 = sand.u32 %s109, 1
        %s302 = scalar_lea.sflag [#allocation4], %s301
        %s303 = sand.u32 %s109, 1
        %s304 = smul.addr %s303, 16
        %s305 = scalar_lea.vmem [#allocation3], %s304
        // Predicated region
        $region74: #{tpu_custom_call.1} parent=68 // pred_check
          %p306 = pneg %p119
        $region75: #{tpu_custom_call.1} parent=68 // pred_check_branch
          %308 = sbr.rel (%p306) target = $region77
        $region76: #{tpu_custom_call.1} parent=68 // pred_region
          %s309 = smul.u32 2, %s21
          %311 = vsyncadd %s302, 0
          %s312 = smul.addr %s309, 2
          %s313 = sadd.s32 %s22, %s312
          %s314 = smul.addr %s313, 8
          %s315 = scalar_lea.hbm %s3, %s314
          %s316 = sshll.u32 %s305, 4
          %s317 = int_to_ptr.vmem [resolvable:$true] %s316
          %s318 = sshll.u32 %s315, 4
          %s319 = int_to_ptr.hbm [resolvable:$true] %s318
          %324 = dma.vmem_to_hbm [thread:$0]  %s317, 256, %s319, %s302, 128, 256, 8
        $region77: #{tpu_custom_call.1} parent=68 // pred_fallthru
          _
      $region69: #{tpu_custom_call.1} parent=5 // pred_fallthru
        _
      %p325 = scmp.le.s32.totalorder 2, %s12
      // Predicated region
      $region78: #{tpu_custom_call.1} parent=5 // pred_check
        %p326 = pneg %p325
      $region79: #{tpu_custom_call.1} parent=5 // pred_check_branch
        %328 = sbr.rel (%p326) target = $region81
      $region80: #{tpu_custom_call.1} parent=5 // pred_region
        %s329 = ssub.s32 %s12, 2
        // Predicated region
        $region82: #{tpu_custom_call.1} parent=80 // pred_check
          %p330 = pneg %p125
        $region83: #{tpu_custom_call.1} parent=80 // pred_check_branch
          %332 = sbr.rel (%p330) target = $region85
        $region84: #{tpu_custom_call.1} parent=80 // pred_region
          %s333 = sand.u32 %s110, 1
          %s334 = scalar_lea.sflag [#allocation4], %s333
          %s335 = sand.u32 %s110, 1
          %s336 = smul.addr %s335, 16
          %s337 = scalar_lea.vmem [#allocation3], %s336
          %339 = dma.done %s334, 256
        $region85: #{tpu_custom_call.1} parent=80 // pred_fallthru
          _
      $region81: #{tpu_custom_call.1} parent=5 // pred_fallthru
        _
    $region6: #{tpu_custom_call.1} parent=1 // loop_footer
      %s16 = sadd.s32 1, %s12
    $region7: #{tpu_custom_call.1} parent=1 // loop_footer_branch
      %11 = sbr.rel target = $region3
    $region8: #{tpu_custom_call.1} parent=1 // loop_exit
      _
    %340 = vsyncpa [#allocation4], 1
    %s341 = scalar_lea.sflag [#allocation4], 1
    %342 = vsyncpa %s341, 1

</llo_original>
